<compile_context>
chip_gen: v7x
topology: tpu7x:2x2x1
jax: 0.10.0
libtpu: 0.0.40
codegen_flags: <defaults>
</compile_context>

<pallas_src>
import jax
import jax.numpy as jnp
from jax.experimental import pallas as pl
from jax.experimental.pallas import tpu as pltpu

_BN_EPS = 1e-5


def mlp_img2text_kernel(res_ref, w_ref, gb_ref, out_ref):
    # fc1_img without bias (cancelled by training-mode BN mean subtraction).
    # f32 MXU matmul, f32 accumulation.
    h = jnp.dot(res_ref[...], w_ref[...], preferred_element_type=jnp.float32)

    # Training-mode BatchNorm1d statistics (f32, biased variance, two-pass).
    mean = jnp.mean(h, axis=0, keepdims=True)
    var = jnp.mean((h - mean) ** 2, axis=0, keepdims=True)
    inv_std = jax.lax.rsqrt(var + _BN_EPS)

    # Fold affine params into the normalization: one FMA over the (B, A) tile.
    gamma = gb_ref[0:1, :]
    beta = gb_ref[1:2, :]
    scale = inv_std * gamma                # (1, A)
    shift = beta - mean * scale            # (1, A)
    out_ref[...] = (h * scale + shift).astype(out_ref.dtype)


def mlp_image2text(res, w_t, gamma=None, beta=None):
    """Forward of MLP_Image2Text: BatchNorm1d(Linear(res)), training-mode BN.

    res:   (B, resSize) f32.
    w_t:   (resSize, attSize) = fc1_img.weight^T, f32.
    gamma/beta: optional (attSize,) BN affine params (PyTorch defaults 1 / 0).
    The Linear bias is intentionally omitted: training-mode BN cancels it.
    """
    B, R = res.shape
    A = w_t.shape[1]

    if gamma is None:
        gamma = jnp.ones((A,), jnp.float32)
    if beta is None:
        beta = jnp.zeros((A,), jnp.float32)
    gb = jnp.concatenate(
        [jnp.asarray(gamma, jnp.float32).reshape(1, A),
         jnp.asarray(beta, jnp.float32).reshape(1, A)], axis=0)   # (2, A)

    vmem = pl.BlockSpec(memory_space=pltpu.MemorySpace.VMEM)
    bytes_accessed = 4 * (B * R + R * A + 2 * A + B * A)

    return pl.pallas_call(
        mlp_img2text_kernel,
        out_shape=jax.ShapeDtypeStruct((B, A), jnp.float32),
        in_specs=[vmem, vmem, vmem],
        out_specs=vmem,
        cost_estimate=pl.CostEstimate(
            flops=2 * B * R * A,
            transcendentals=A,            # one rsqrt per feature
            bytes_accessed=bytes_accessed),
    )(res.astype(jnp.float32), w_t.astype(jnp.float32), gb)


if __name__ == "__main__":
    # Small shapes consistent with the module: res (B, resSize) -> (B, attSize)
    B, resSize, attSize = 8, 256, 128

    key = jax.random.PRNGKey(0)
    k_res, k_w, k_b, k_g, k_be = jax.random.split(key, 5)

    # nn.Linear default init: U(-1/sqrt(in), 1/sqrt(in))
    bound = 1.0 / (resSize ** 0.5)
    w = jax.random.uniform(k_w, (attSize, resSize), jnp.float32, -bound, bound)
    b = jax.random.uniform(k_b, (attSize,), jnp.float32, -bound, bound)

    res = jax.random.normal(k_res, (B, resSize), jnp.float32)
    w_t = w.T  # stored transposed so the kernel does res @ W^T

    # Exact f32 module math (bias included; training-mode BN cancels it).
    h32 = jnp.dot(res, w_t, precision=jax.lax.Precision.HIGHEST) + b
    m32 = h32.mean(axis=0, keepdims=True)
    v32 = ((h32 - m32) ** 2).mean(axis=0, keepdims=True)
    ref = (h32 - m32) / jnp.sqrt(v32 + _BN_EPS)

    # ---- default affine (gamma=1, beta=0) ----
    out = jax.block_until_ready(mlp_image2text(res, w_t))
    assert out.shape == (B, attSize)
    assert bool(jnp.allclose(out, ref, atol=1e-2, rtol=1e-2)), \
        "mismatch vs f32 module reference (default affine)"

    # ---- non-default affine parameters ----
    gamma = 1.0 + 0.1 * jax.random.normal(k_g, (attSize,), jnp.float32)
    beta = 0.1 * jax.random.normal(k_be, (attSize,), jnp.float32)
    out_aff = jax.block_until_ready(mlp_image2text(res, w_t, gamma, beta))
    ref_aff = ref * gamma + beta
    assert bool(jnp.allclose(out_aff, ref_aff, atol=1e-2, rtol=1e-2)), \
        "mismatch vs f32 module reference (custom affine)"

    print("KERNEL_OK")
</pallas_src>

<mosaic_0001>
module attributes {stable_mosaic.version = 11 : i64} {
  func.func @mlp_img2text_kernel(%arg0: memref<8x256xf32, #tpu.memory_space<vmem>>, %arg1: memref<256x128xf32, #tpu.memory_space<vmem>>, %arg2: memref<2x128xf32, #tpu.memory_space<vmem>>, %arg3: memref<8x128xf32, #tpu.memory_space<vmem>>) attributes {dimension_semantics = [], scalar_prefetch = 0 : i64, scratch_operands = 0 : i64, tpu.core_type = #tpu.core_type<tc>} {
    %c0 = arith.constant 0 : index
    %c0_0 = arith.constant 0 : index
    %0 = vector.load %arg0[%c0, %c0_0] : memref<8x256xf32, #tpu.memory_space<vmem>>, vector<8x256xf32>
    %c0_1 = arith.constant 0 : index
    %c0_2 = arith.constant 0 : index
    %1 = vector.load %arg1[%c0_1, %c0_2] : memref<256x128xf32, #tpu.memory_space<vmem>>, vector<256x128xf32>
    %cst = arith.constant dense<0.000000e+00> : vector<8x128xf32>
    %2 = tpu.matmul %0, %1, %cst {dimension_numbers = #tpu.dot_dimension_numbers<[1], [0], [0], [1], [0, 0, 1, 1], [], []>} : vector<8x256xf32>, vector<256x128xf32>, vector<8x128xf32> -> vector<8x128xf32>
    %cst_3 = arith.constant dense<0.000000e+00> : vector<128xf32>
    %3 = vector.multi_reduction <add>, %2, %cst_3 [0] : vector<8x128xf32> to vector<128xf32>
    %4 = vector.shape_cast %3 : vector<128xf32> to vector<1x128xf32>
    %cst_4 = arith.constant 8.000000e+00 : f32
    %5 = vector.broadcast %cst_4 : f32 to vector<1x128xf32>
    %6 = arith.divf %4, %5 : vector<1x128xf32>
    %7 = vector.broadcast %6 : vector<1x128xf32> to vector<8x128xf32>
    %8 = arith.subf %2, %7 : vector<8x128xf32>
    %9 = arith.mulf %8, %8 : vector<8x128xf32>
    %cst_5 = arith.constant dense<0.000000e+00> : vector<128xf32>
    %10 = vector.multi_reduction <add>, %9, %cst_5 [0] : vector<8x128xf32> to vector<128xf32>
    %11 = vector.shape_cast %10 : vector<128xf32> to vector<1x128xf32>
    %cst_6 = arith.constant 8.000000e+00 : f32
    %12 = vector.broadcast %cst_6 : f32 to vector<1x128xf32>
    %13 = arith.divf %11, %12 : vector<1x128xf32>
    %cst_7 = arith.constant 9.99999974E-6 : f32
    %14 = vector.broadcast %cst_7 : f32 to vector<1x128xf32>
    %15 = arith.addf %13, %14 : vector<1x128xf32>
    %16 = math.rsqrt %15 : vector<1x128xf32>
    %c0_8 = arith.constant 0 : index
    %c0_9 = arith.constant 0 : index
    %17 = vector.load %arg2[%c0_8, %c0_9] : memref<2x128xf32, #tpu.memory_space<vmem>>, vector<1x128xf32>
    %c1 = arith.constant 1 : index
    %c0_10 = arith.constant 0 : index
    %18 = vector.load %arg2[%c1, %c0_10] : memref<2x128xf32, #tpu.memory_space<vmem>>, vector<1x128xf32>
    %19 = arith.mulf %16, %17 : vector<1x128xf32>
    %20 = arith.mulf %6, %19 : vector<1x128xf32>
    %21 = arith.subf %18, %20 : vector<1x128xf32>
    %22 = vector.broadcast %19 : vector<1x128xf32> to vector<8x128xf32>
    %23 = arith.mulf %2, %22 : vector<8x128xf32>
    %24 = vector.broadcast %21 : vector<1x128xf32> to vector<8x128xf32>
    %25 = arith.addf %23, %24 : vector<8x128xf32>
    %c0_11 = arith.constant 0 : index
    %c0_12 = arith.constant 0 : index
    %26 = vector.load %arg3[%c0_11, %c0_12] : memref<8x128xf32, #tpu.memory_space<vmem>>, vector<8x128xf32>
    tpu.vector_store %arg3[%c0_11, %c0_12], %25 {strides = array<i32>} : memref<8x128xf32, #tpu.memory_space<vmem>>, vector<8x128xf32>,
    return
  }
}

</mosaic_0001>

<llo_original>
// kernel: tpu_custom_call.1
$region0: #{tpu_custom_call.1}
  #allocation0 [shape = 'u32[]', space=smem, size = 0x4, offset = 0x4, fixed_abs, tag = 'smem constant byte address 0x4 - core index']
  #allocation1 [shape = 'u32[144,128]{1,0:T(1,128)}', space=vmem, size = 0x12000, scoped, tag = 'internal scratch']
  %s0 = inlined_call_operand.hbm [shape: f32[8,256], index: 0, kind: input, shape index: {}]
  %s1 = inlined_call_operand.hbm [shape: f32[256,128], index: 1, kind: input, shape index: {}]
  %s2 = inlined_call_operand.vmem [shape: f32[2,128], index: 2, kind: input, shape index: {}]
  %s3 = inlined_call_operand.hbm [shape: f32[8,128], index: 3, kind: output, shape index: {}]
  %s4 = sld [smem:[#allocation0]]
  $region30: #{tpu_custom_call.1} parent=0
    _
  %s6 = ssub.s32 1, %s4
  %s7 = scalar_select 0, %s6, %s4
  $region1: #{tpu_custom_call.1} parent=0
    #allocation2 [shape = 'u8[8192]{0}', space=vmem, size = 0x2000, scoped, tag = 'input window, operand 0, single buffered']
    #allocation3 [shape = 's32[1]{0}', space=sflag, size = 0x4, scoped, tag = 'scoped memory for tpu_custom_call.1']
    #allocation4 [shape = 's32[1]{0}', space=sflag, size = 0x4, scoped, tag = 'scoped memory for tpu_custom_call.1']
    #allocation5 [shape = 'u8[131072]{0}', space=vmem, size = 0x20000, scoped, tag = 'input window, operand 1, single buffered']
    #allocation6 [shape = 's32[1]{0}', space=sflag, size = 0x4, scoped, tag = 'scoped memory for tpu_custom_call.1']
    #allocation7 [shape = 'u8[4096]{0}', space=vmem, size = 0x1000, scoped, tag = 'output window, operand 0, single buffered']
    %8 = vsyncpa [#allocation3], 0
    %9 = vsyncpa [#allocation6], 0
    %10 = vsyncpa [#allocation4], 0
    // Predicated region
    $region2: #{tpu_custom_call.1} parent=1 // pred_check
      _
    $region3: #{tpu_custom_call.1} parent=1 // pred_check_branch
      %12 = sbr.rel (0) target = $region5
    $region4: #{tpu_custom_call.1} parent=1 // pred_region
      %s14 = ssub.s32 256, 256
      %15 = vsyncadd [#allocation3], %s14
      %s17 = sshll.u32 [#allocation2], 4
      %s18 = int_to_ptr.vmem [resolvable:$true] %s17
      %20 = dma.hbm_to_vmem [thread:$0]  %s0, 256, %s18, [#allocation3]
    $region5: #{tpu_custom_call.1} parent=1 // pred_fallthru
      _
    // Predicated region
    $region6: #{tpu_custom_call.1} parent=1 // pred_check
      _
    $region7: #{tpu_custom_call.1} parent=1 // pred_check_branch
      %22 = sbr.rel (0) target = $region9
    $region8: #{tpu_custom_call.1} parent=1 // pred_region
      %s24 = ssub.s32 4096, 4096
      %25 = vsyncadd [#allocation6], %s24
      %s26 = sshll.u32 [#allocation5], 4
      %s27 = int_to_ptr.vmem [resolvable:$true] %s26
      %32 = dma.hbm_to_vmem [thread:$0]  %s1, 4096, %s27, [#allocation6], 128, 128, 8
    $region9: #{tpu_custom_call.1} parent=1 // pred_fallthru
      _
    // Predicated region
    $region10: #{tpu_custom_call.1} parent=1 // pred_check
      _
    $region11: #{tpu_custom_call.1} parent=1 // pred_check_branch
      %34 = sbr.rel (0) target = $region13
    $region12: #{tpu_custom_call.1} parent=1 // pred_region
      _
    $region13: #{tpu_custom_call.1} parent=1 // pred_fallthru
      _
    // Predicated region
    $region14: #{tpu_custom_call.1} parent=1 // pred_check
      _
    $region15: #{tpu_custom_call.1} parent=1 // pred_check_branch
      %36 = sbr.rel (0) target = $region17
    $region16: #{tpu_custom_call.1} parent=1 // pred_region
      %37 = dma.done [#allocation3], 256
    $region17: #{tpu_custom_call.1} parent=1 // pred_fallthru
      _
    // Predicated region
    $region18: #{tpu_custom_call.1} parent=1 // pred_check
      _
    $region19: #{tpu_custom_call.1} parent=1 // pred_check_branch
      %39 = sbr.rel (0) target = $region21
    $region20: #{tpu_custom_call.1} parent=1 // pred_region
      %40 = dma.done [#allocation6], 4096
    $region21: #{tpu_custom_call.1} parent=1 // pred_fallthru
      _
    %v41 = vld [vmem:[#allocation2] sm:$0xff]
    %v42 = vld [vmem:[#allocation2 + $0x8] sm:$0xff]
    %v43 = vld [vmem:[#allocation5] sm:$0xff]
    %v44 = vld [vmem:[#allocation5 + $0x8] sm:$0xff]
    %v45 = vld [vmem:[#allocation5 + $0x10] sm:$0xff]
    %v46 = vld [vmem:[#allocation5 + $0x18] sm:$0xff]
    %v47 = vld [vmem:[#allocation5 + $0x20] sm:$0xff]
    %v48 = vld [vmem:[#allocation5 + $0x28] sm:$0xff]
    %v49 = vld [vmem:[#allocation5 + $0x30] sm:$0xff]
    %v50 = vld [vmem:[#allocation5 + $0x38] sm:$0xff]
    %v51 = vld [vmem:[#allocation5 + $0x40] sm:$0xff]
    %v52 = vld [vmem:[#allocation5 + $0x48] sm:$0xff]
    %v53 = vld [vmem:[#allocation5 + $0x50] sm:$0xff]
    %v54 = vld [vmem:[#allocation5 + $0x58] sm:$0xff]
    %v55 = vld [vmem:[#allocation5 + $0x60] sm:$0xff]
    %v56 = vld [vmem:[#allocation5 + $0x68] sm:$0xff]
    %v57 = vld [vmem:[#allocation5 + $0x70] sm:$0xff]
    %v58 = vld [vmem:[#allocation5 + $0x78] sm:$0xff]
    %v59 = vld [vmem:[#allocation5 + $0x80] sm:$0xff]
    %v60 = vld [vmem:[#allocation5 + $0x88] sm:$0xff]
    %v61 = vld [vmem:[#allocation5 + $0x90] sm:$0xff]
    %v62 = vld [vmem:[#allocation5 + $0x98] sm:$0xff]
    %v63 = vld [vmem:[#allocation5 + $0xa0] sm:$0xff]
    %v64 = vld [vmem:[#allocation5 + $0xa8] sm:$0xff]
    %v65 = vld [vmem:[#allocation5 + $0xb0] sm:$0xff]
    %v66 = vld [vmem:[#allocation5 + $0xb8] sm:$0xff]
    %v67 = vld [vmem:[#allocation5 + $0xc0] sm:$0xff]
    %v68 = vld [vmem:[#allocation5 + $0xc8] sm:$0xff]
    %v69 = vld [vmem:[#allocation5 + $0xd0] sm:$0xff]
    %v70 = vld [vmem:[#allocation5 + $0xd8] sm:$0xff]
    %v71 = vld [vmem:[#allocation5 + $0xe0] sm:$0xff]
    %v72 = vld [vmem:[#allocation5 + $0xe8] sm:$0xff]
    %v73 = vld [vmem:[#allocation5 + $0xf0] sm:$0xff]
    %v74 = vld [vmem:[#allocation5 + $0xf8] sm:$0xff]
    %75 = vmatprep.subr.mxu0 0.0
    %76 = vmatpush1.msra.mxu0 %v43
    %77 = vmatprep.subr.mxu0 0.0
    %78 = vmatpush1.msra.mxu0 %v44
    %79 = vmatprep.subr.mxu0 0.0
    %80 = vmatpush1.msra.mxu0 %v45
    %81 = vmatprep.subr.mxu0 0.0
    %82 = vmatpush1.msra.mxu0 %v46
    %83 = vmatprep.subr.mxu0 0.0
    %84 = vmatpush1.msra.mxu0 %v47
    %85 = vmatprep.subr.mxu0 0.0
    %86 = vmatpush1.msra.mxu0 %v48
    %87 = vmatprep.subr.mxu0 0.0
    %88 = vmatpush1.msra.mxu0 %v49
    %89 = vmatprep.subr.mxu0 0.0
    %90 = vmatpush1.msra.mxu0 %v50
    %91 = vmatprep.subr.mxu0 0.0
    %92 = vmatpush1.msra.mxu0 %v51
    %93 = vmatprep.subr.mxu0 0.0
    %94 = vmatpush1.msra.mxu0 %v52
    %95 = vmatprep.subr.mxu0 0.0
    %96 = vmatpush1.msra.mxu0 %v53
    %97 = vmatprep.subr.mxu0 0.0
    %98 = vmatpush1.msra.mxu0 %v54
    %99 = vmatprep.subr.mxu0 0.0
    %100 = vmatpush1.msra.mxu0 %v55
    %101 = vmatprep.subr.mxu0 0.0
    %102 = vmatpush1.msra.mxu0 %v56
    %103 = vmatprep.subr.mxu0 0.0
    %104 = vmatpush1.msra.mxu0 %v57
    %105 = vmatprep.subr.mxu0 0.0
    %106 = vmatpush1.msra.mxu0 %v58
    %107 = vmatprep.subr.mxu0 0.0
    %108 = vmatpush1.msra.mxu0 %v59
    %109 = vmatprep.subr.mxu0 0.0
    %110 = vmatpush1.msra.mxu0 %v60
    %111 = vmatprep.subr.mxu0 0.0
    %112 = vmatpush1.msra.mxu0 %v61
    %113 = vmatprep.subr.mxu0 0.0
    %114 = vmatpush1.msra.mxu0 %v62
    %115 = vmatprep.subr.mxu0 0.0
    %116 = vmatpush1.msra.mxu0 %v63
    %117 = vmatprep.subr.mxu0 0.0
    %118 = vmatpush1.msra.mxu0 %v64
    %119 = vmatprep.subr.mxu0 0.0
    %120 = vmatpush1.msra.mxu0 %v65
    %121 = vmatprep.subr.mxu0 0.0
    %122 = vmatpush1.msra.mxu0 %v66
    %123 = vmatprep.subr.mxu0 0.0
    %124 = vmatpush1.msra.mxu0 %v67
    %125 = vmatprep.subr.mxu0 0.0
    %126 = vmatpush1.msra.mxu0 %v68
    %127 = vmatprep.subr.mxu0 0.0
    %128 = vmatpush1.msra.mxu0 %v69
    %129 = vmatprep.subr.mxu0 0.0
    %130 = vmatpush1.msra.mxu0 %v70
    %131 = vmatprep.subr.mxu0 0.0
    %132 = vmatpush1.msra.mxu0 %v71
    %133 = vmatprep.subr.mxu0 0.0
    %134 = vmatpush1.msra.mxu0 %v72
    %135 = vmatprep.subr.mxu0 0.0
    %136 = vmatpush1.msra.mxu0 %v73
    %137 = vmatprep.subr.mxu0 0.0
    %138 = vmatpush1.msra.mxu0 %v74
    %139 = vmatprep.mubr.f32.mxu0 %v42
    %140 = vmatmul.mubr.f32.gmra.mrb[0].mxu0 %v41
    %v141 = vpop.f32.mrb[0].mxu0
    %v142 = vadd.f32 0.0, %v141
    %v143 = vpop.f32.mrb[0].mxu0
    %144 = vdwg.mxu0
    %v145 = vrot.slane %v142, 4
    %v146 = vadd.f32 %v142, %v145
    %v147 = vrot.slane %v146, 2
    %v148 = vadd.f32 %v146, %v147
    %v149 = vrot.slane %v148, 1
    %v150 = vadd.f32 %v148, %v149
    %v151 = vrcp.pop 8.0
    %v152 = vmul.f32 %v150, %v151
    %v153 = vsub.f32 %v142, %v152
    %v154 = vmul.f32 %v153, %v153
    %v155 = vrot.slane %v154, 4
    %v156 = vadd.f32 %v154, %v155
    %v157 = vrot.slane %v156, 2
    %v158 = vadd.f32 %v156, %v157
    %v159 = vrot.slane %v158, 1
    %v160 = vadd.f32 %v158, %v159
    %v161 = vmul.f32 %v160, %v151
    %v162 = vadd.f32 %v161, 1e-05
    %v163 = vrsqrt.pop %v162
    %v164 = vld [vmem:[%s2] sm:$0x1]
    %v165 = vld [vmem:[%s2 + $0x1] sm:$0x1]
    %v166 = vmul.f32 %v163, %v164
    %v167 = vmul.f32 %v152, %v166
    %v168 = vsub.f32 %v165, %v167
    %v169 = vlaneseq
    %v170 = vshrl.u32 %v169, 7
    %v171 = vsub.s32 0, %v170
    %v172 = vrot.slane %v166, %v171
    %v173 = vmul.f32 %v142, %v172
    %v174 = vlaneseq
    %v175 = vshrl.u32 %v174, 7
    %v176 = vsub.s32 0, %v175
    %v177 = vrot.slane %v168, %v176
    %v178 = vadd.f32 %v173, %v177
    %179 = vst [vmem:[#allocation7] sm:$0xff] %v178
    // Predicated region
    $region22: #{tpu_custom_call.1} parent=1 // pred_check
      _
    $region23: #{tpu_custom_call.1} parent=1 // pred_check_branch
      %181 = sbr.rel (0) target = $region25
    $region24: #{tpu_custom_call.1} parent=1 // pred_region
      %s183 = ssub.s32 128, 128
      %184 = vsyncadd [#allocation4], %s183
      %s186 = sshll.u32 [#allocation7], 4
      %s187 = int_to_ptr.vmem [resolvable:$true] %s186
      %189 = dma.vmem_to_hbm [thread:$0]  %s187, 128, %s3, [#allocation4]
    $region25: #{tpu_custom_call.1} parent=1 // pred_fallthru
      _
    // Predicated region
    $region26: #{tpu_custom_call.1} parent=1 // pred_check
      _
    $region27: #{tpu_custom_call.1} parent=1 // pred_check_branch
      %191 = sbr.rel (0) target = $region29
    $region28: #{tpu_custom_call.1} parent=1 // pred_region
      %192 = dma.done [#allocation4], 128
    $region29: #{tpu_custom_call.1} parent=1 // pred_fallthru
      _
    %193 = vsyncpa [#allocation3], 1
    %194 = vsyncpa [#allocation6], 1
    %195 = vsyncpa [#allocation4], 1

</llo_original>
